<compile_context>
chip_gen: v7x
topology: tpu7x:2x2x1
jax: 0.10.0
libtpu: 0.0.40
codegen_flags: <defaults>
</compile_context>

<pallas_src>
import jax
import jax.numpy as jnp
from jax.experimental import pallas as pl
from jax.experimental.pallas import tpu as pltpu

LANE = 128        # padded class dimension = one full vreg lane width
NEG_BIG = -1e30   # masks padded logit columns out of the softmax


def fcnet_kernel(x_ref, w_ref, b_ref, o_ref):
    # x_ref: (TB, 784) f32   w_ref: (784, 128) f32   b_ref: (1, 128) f32
    # o_ref: (TB, C) f32 with C = 10 (unpadded writeback)
    c = o_ref.shape[-1]

    # VMEM-side bf16 cast (HBM still streams f32, so no extra HBM traffic);
    # f32 accumulation keeps the result accurate to ~1e-3 relative.
    x = x_ref[...].astype(jnp.bfloat16)
    w = w_ref[...].astype(jnp.bfloat16)
    b = b_ref[...]

    # Linear: x @ W^T + b (W pre-transposed / lane-padded in prepare step).
    # Padded columns: W == 0, bias == -1e30  =>  logits == -1e30 there.
    logits = jnp.dot(x, w, preferred_element_type=jnp.float32) + b  # (TB, 128)

    # Numerically stable log_softmax over the class axis; the -1e30 padded
    # columns contribute exp(...) == 0 and never win the max, so the first C
    # lanes are exact.
    m = jnp.max(logits, axis=-1, keepdims=True)
    shifted = logits - m
    lse = jnp.log(jnp.sum(jnp.exp(shifted), axis=-1, keepdims=True))

    # Store only the C real classes (masked vst on the VMEM side is negligible
    # next to the x load stream; the HBM writeback shrinks 128 -> 10 lanes).
    o_ref[...] = (shifted - lse)[:, :c]


def prepare_fcnet_params(weight, bias):
    """One-time parameter prep (hoisted out of the forward; cache the result).

    weight: (10, 784) f32 in PyTorch nn.Linear layout; bias: (10,) f32.
    Returns (W^T zero-padded to 128 lanes, bias padded with -1e30).
    """
    out_features, in_features = weight.shape
    w_t = jnp.zeros((in_features, LANE), jnp.float32).at[:, :out_features].set(
        weight.T.astype(jnp.float32))
    b_pad = jnp.full((1, LANE), NEG_BIG, dtype=jnp.float32).at[0, :out_features].set(
        bias.astype(jnp.float32))
    return w_t, b_pad


def fcnet_forward(x_nchw, w_t, b_pad, *, num_classes=10, tile_b=1024,
                  vmem_limit_bytes=None):
    """x_nchw: (B, 1, 28, 28) f32; (w_t, b_pad) from prepare_fcnet_params.
    Returns log-probabilities (B, num_classes) f32.

    tile_b: rows of x per grid step.  1024 fits under default scoped-VMEM
    limits on every generation (v5e/v6e/v7x).  On v6e/v7x tile_b=2048 is a
    small win (raise vmem_limit_bytes to ~48-64 MiB on v6e); keep 1024 on v5e
    unless the scoped limit is raised explicitly.
    """
    B = x_nchw.shape[0]
    x_flat = x_nchw.reshape(B, -1).astype(jnp.float32)               # (B, 784)
    K = x_flat.shape[1]                                              # 784
    C = num_classes                                                  # 10

    # Row tile: multiple of 8, capped by tile_b.
    TB = min(tile_b, max(8, ((B + 7) // 8) * 8))
    grid = (pl.cdiv(B, TB),)

    return pl.pallas_call(
        fcnet_kernel,
        out_shape=jax.ShapeDtypeStruct((B, C), jnp.float32),
        grid_spec=pltpu.PrefetchScalarGridSpec(
            num_scalar_prefetch=0,
            grid=grid,
            in_specs=[
                # x: streamed + auto double-buffered.
                pl.BlockSpec((TB, K), lambda i: (i, 0)),
                # W / bias: constant index_map -> DMA'd once, single buffer.
                pl.BlockSpec((K, LANE), lambda i: (0, 0),
                             pipeline_mode=pl.Buffered(1)),
                pl.BlockSpec((1, LANE), lambda i: (0, 0),
                             pipeline_mode=pl.Buffered(1)),
            ],
            # Unpadded output block: last dim equals the full array dim (10),
            # so the per-step HBM writeback stays a contiguous linear region.
            out_specs=pl.BlockSpec((TB, C), lambda i: (i, 0)),
        ),
        compiler_params=pltpu.CompilerParams(
            dimension_semantics=("parallel",),   # v7x: shard batch over 2 TCs
            vmem_limit_bytes=vmem_limit_bytes),
    )(x_flat, w_t, b_pad)


if __name__ == "__main__":
    key = jax.random.PRNGKey(0)
    k_x, k_w, k_b = jax.random.split(key, 3)

    B = 2
    # MNIST-like input, NCHW like PyTorch
    x = jax.random.normal(k_x, (B, 1, 28, 28), dtype=jnp.float32)

    # Deterministic params matching nn.Linear(28*28, 10) shapes
    in_features, out_features = 28 * 28, 10
    bound = 1.0 / (in_features ** 0.5)
    weight = jax.random.uniform(k_w, (out_features, in_features),
                                minval=-bound, maxval=bound, dtype=jnp.float32)
    bias = jax.random.uniform(k_b, (out_features,),
                              minval=-bound, maxval=bound, dtype=jnp.float32)

    # One-time param prep (would be cached alongside the params in practice).
    w_t, b_pad = prepare_fcnet_params(weight, bias)

    out = fcnet_forward(x, w_t, b_pad, num_classes=out_features)
    out = jax.block_until_ready(out)

    # Sanity: reference in plain JAX (f32).  Kernel uses bf16 MXU operands
    # with f32 accumulation, so tolerance is relaxed vs the old 1e-5.
    ref_logits = x.reshape(B, -1) @ weight.T + bias
    ref = jax.nn.log_softmax(ref_logits, axis=1)
    assert out.shape == (B, 10)
    max_err = jnp.max(jnp.abs(out - ref))
    assert jnp.allclose(out, ref, atol=5e-2, rtol=1e-2), (
        f"mismatch vs reference: max abs diff {max_err}")

    print("KERNEL_OK")
</pallas_src>

<mosaic_0001>
module attributes {stable_mosaic.version = 11 : i64} {
  func.func @fcnet_kernel(%arg0: i32, %arg1: memref<8x784xf32, #tpu.memory_space<vmem>>, %arg2: memref<784x128xf32, #tpu.memory_space<vmem>>, %arg3: memref<1x128xf32, #tpu.memory_space<vmem>>, %arg4: memref<8x10xf32, #tpu.memory_space<vmem>>) attributes {dimension_semantics = [#tpu.dimension_semantics<parallel>], iteration_bounds = array<i64: 1>, scalar_prefetch = 0 : i64, scratch_operands = 0 : i64, tpu.core_type = #tpu.core_type<tc>, window_params = [{transform_indices = @transform_0, window_bounds = array<i64: 8, 784>}, {pipeline_mode = #tpu.pipeline_mode<synchronous>, transform_indices = @transform_1, window_bounds = array<i64: 784, 128>}, {pipeline_mode = #tpu.pipeline_mode<synchronous>, transform_indices = @transform_2, window_bounds = array<i64: 1, 128>}, {transform_indices = @transform_3, window_bounds = array<i64: 8, 10>}]} {
    %c0 = arith.constant 0 : index
    %c0_0 = arith.constant 0 : index
    %0 = vector.load %arg1[%c0, %c0_0] : memref<8x784xf32, #tpu.memory_space<vmem>>, vector<8x784xf32>
    %1 = arith.truncf %0 : vector<8x784xf32> to vector<8x784xbf16>
    %c0_1 = arith.constant 0 : index
    %c0_2 = arith.constant 0 : index
    %2 = vector.load %arg2[%c0_1, %c0_2] : memref<784x128xf32, #tpu.memory_space<vmem>>, vector<784x128xf32>
    %3 = arith.truncf %2 : vector<784x128xf32> to vector<784x128xbf16>
    %c0_3 = arith.constant 0 : index
    %c0_4 = arith.constant 0 : index
    %4 = vector.load %arg3[%c0_3, %c0_4] : memref<1x128xf32, #tpu.memory_space<vmem>>, vector<1x128xf32>
    %cst = arith.constant dense<0.000000e+00> : vector<8x128xf32>
    %5 = tpu.matmul %1, %3, %cst {dimension_numbers = #tpu.dot_dimension_numbers<[1], [0], [0], [1], [0, 0, 1, 1], [], []>} : vector<8x784xbf16>, vector<784x128xbf16>, vector<8x128xf32> -> vector<8x128xf32>
    %6 = vector.broadcast %4 : vector<1x128xf32> to vector<8x128xf32>
    %7 = arith.addf %5, %6 : vector<8x128xf32>
    %cst_5 = arith.constant dense<0xFF800000> : vector<8xf32>
    %8 = vector.multi_reduction <maximumf>, %7, %cst_5 [1] : vector<8x128xf32> to vector<8xf32>
    %9 = vector.shape_cast %8 : vector<8xf32> to vector<8x1xf32>
    %10 = vector.broadcast %9 : vector<8x1xf32> to vector<8x128xf32>
    %11 = arith.subf %7, %10 : vector<8x128xf32>
    %12 = math.exp %11 : vector<8x128xf32>
    %cst_6 = arith.constant dense<0.000000e+00> : vector<8xf32>
    %13 = vector.multi_reduction <add>, %12, %cst_6 [1] : vector<8x128xf32> to vector<8xf32>
    %14 = vector.shape_cast %13 : vector<8xf32> to vector<8x1xf32>
    %15 = math.log %14 : vector<8x1xf32>
    %16 = vector.broadcast %15 : vector<8x1xf32> to vector<8x128xf32>
    %17 = arith.subf %11, %16 : vector<8x128xf32>
    %18 = vector.extract_strided_slice %17 {offsets = [0, 0], sizes = [8, 10], strides = [1, 1]} : vector<8x128xf32> to vector<8x10xf32>
    %c0_7 = arith.constant 0 : index
    %c0_8 = arith.constant 0 : index
    %19 = vector.load %arg4[%c0_7, %c0_8] : memref<8x10xf32, #tpu.memory_space<vmem>>, vector<8x10xf32>
    tpu.vector_store %arg4[%c0_7, %c0_8], %18 {strides = array<i32>} : memref<8x10xf32, #tpu.memory_space<vmem>>, vector<8x10xf32>,
    return
  }
  func.func @transform_0(%arg0: i32) -> (i32, i32) {
    %c0_i32 = arith.constant 0 : i32
    %c0_i32_0 = arith.constant 0 : i32
    return %arg0, %c0_i32 : i32, i32
  }
  func.func @transform_1(%arg0: i32) -> (i32, i32) {
    %c0_i32 = arith.constant 0 : i32
    %c0_i32_0 = arith.constant 0 : i32
    %c0_i32_1 = arith.constant 0 : i32
    return %c0_i32, %c0_i32_0 : i32, i32
  }
  func.func @transform_2(%arg0: i32) -> (i32, i32) {
    %c0_i32 = arith.constant 0 : i32
    %c0_i32_0 = arith.constant 0 : i32
    %c0_i32_1 = arith.constant 0 : i32
    return %c0_i32, %c0_i32_0 : i32, i32
  }
  func.func @transform_3(%arg0: i32) -> (i32, i32) {
    %c0_i32 = arith.constant 0 : i32
    %c0_i32_0 = arith.constant 0 : i32
    return %arg0, %c0_i32 : i32, i32
  }
}

</mosaic_0001>

<llo_original>
// kernel: tpu_custom_call.1
$region0: #{tpu_custom_call.1}
  #allocation0 [shape = 'u32[]', space=smem, size = 0x4, offset = 0x4, fixed_abs, tag = 'smem constant byte address 0x4 - core index']
  #allocation1 [shape = 'u32[144,128]{1,0:T(1,128)}', space=vmem, size = 0x12000, scoped, tag = 'internal scratch']
  %s0 = inlined_call_operand.hbm [shape: f32[2,784], index: 0, kind: input, shape index: {}]
  %s1 = inlined_call_operand.hbm [shape: f32[784,128], index: 1, kind: input, shape index: {}]
  %s2 = inlined_call_operand.vmem [shape: f32[1,128], index: 2, kind: input, shape index: {}]
  %s3 = inlined_call_operand.hbm [shape: f32[2,10], index: 3, kind: output, shape index: {}]
  %s4 = sld [smem:[#allocation0]]
  $region30: #{tpu_custom_call.1} parent=0
    _
  %s6 = ssub.s32 1, %s4
  %s7 = scalar_select 0, %s6, %s4
  $region1: #{tpu_custom_call.1} parent=0
    #allocation2 [shape = 'u8[28672]{0}', space=vmem, size = 0x7000, scoped, tag = 'input window, operand 0, single buffered']
    #allocation3 [shape = 's32[1]{0}', space=sflag, size = 0x4, scoped, tag = 'scoped memory for tpu_custom_call.1']
    #allocation4 [shape = 's32[1]{0}', space=sflag, size = 0x4, scoped, tag = 'scoped memory for tpu_custom_call.1']
    #allocation5 [shape = 'u8[401408]{0}', space=vmem, size = 0x62000, scoped, tag = 'input window, operand 1, single buffered']
    #allocation6 [shape = 's32[1]{0}', space=sflag, size = 0x4, scoped, tag = 'scoped memory for tpu_custom_call.1']
    #allocation7 [shape = 'u8[4096]{0}', space=vmem, size = 0x1000, scoped, tag = 'output window, operand 0, single buffered']
    %8 = vsyncpa [#allocation3], 0
    %9 = vsyncpa [#allocation6], 0
    %10 = vsyncpa [#allocation4], 0
    // Predicated region
    $region2: #{tpu_custom_call.1} parent=1 // pred_check
      _
    $region3: #{tpu_custom_call.1} parent=1 // pred_check_branch
      %12 = sbr.rel (0) target = $region5
    $region4: #{tpu_custom_call.1} parent=1 // pred_region
      %s14 = ssub.s32 896, 224
      %15 = vsyncadd [#allocation3], %s14
      %s16 = sshll.u32 [#allocation2], 4
      %s17 = int_to_ptr.vmem [resolvable:$true] %s16
      %22 = dma.hbm_to_vmem [thread:$0]  %s0, 224, %s17, [#allocation3], 224, 224, 14
    $region5: #{tpu_custom_call.1} parent=1 // pred_fallthru
      _
    // Predicated region
    $region6: #{tpu_custom_call.1} parent=1 // pred_check
      _
    $region7: #{tpu_custom_call.1} parent=1 // pred_check_branch
      %24 = sbr.rel (0) target = $region9
    $region8: #{tpu_custom_call.1} parent=1 // pred_region
      %s26 = ssub.s32 12544, 12544
      %27 = vsyncadd [#allocation6], %s26
      %s28 = sshll.u32 [#allocation5], 4
      %s29 = int_to_ptr.vmem [resolvable:$true] %s28
      %34 = dma.hbm_to_vmem [thread:$0]  %s1, 12544, %s29, [#allocation6], 128, 128, 8
    $region9: #{tpu_custom_call.1} parent=1 // pred_fallthru
      _
    // Predicated region
    $region10: #{tpu_custom_call.1} parent=1 // pred_check
      _
    $region11: #{tpu_custom_call.1} parent=1 // pred_check_branch
      %36 = sbr.rel (0) target = $region13
    $region12: #{tpu_custom_call.1} parent=1 // pred_region
      _
    $region13: #{tpu_custom_call.1} parent=1 // pred_fallthru
      _
    // Predicated region
    $region14: #{tpu_custom_call.1} parent=1 // pred_check
      _
    $region15: #{tpu_custom_call.1} parent=1 // pred_check_branch
      %38 = sbr.rel (0) target = $region17
    $region16: #{tpu_custom_call.1} parent=1 // pred_region
      %39 = dma.done [#allocation3], 896
    $region17: #{tpu_custom_call.1} parent=1 // pred_fallthru
      _
    // Predicated region
    $region18: #{tpu_custom_call.1} parent=1 // pred_check
      _
    $region19: #{tpu_custom_call.1} parent=1 // pred_check_branch
      %41 = sbr.rel (0) target = $region21
    $region20: #{tpu_custom_call.1} parent=1 // pred_region
      %42 = dma.done [#allocation6], 12544
    $region21: #{tpu_custom_call.1} parent=1 // pred_fallthru
      _
    %v44 = vld [vmem:[#allocation2] sm:$0xff]
    %v45 = vld [vmem:[#allocation2 + $0x8] sm:$0x3f]
    %v46 = vld [vmem:[#allocation2 + $0xe] sm:$0xff]
    %v47 = vld [vmem:[#allocation2 + $0x16] sm:$0x3f]
    %v48 = vld [vmem:[#allocation2 + $0x1c] sm:$0xff]
    %v49 = vld [vmem:[#allocation2 + $0x24] sm:$0x3f]
    %v50 = vld [vmem:[#allocation2 + $0x2a] sm:$0xff]
    %v51 = vld [vmem:[#allocation2 + $0x32] sm:$0x3f]
    %v60 = vcombine.low %v44, %v46
    %v61 = vcombine.high %v44, %v46
    %v62 = vcombine.low %v48, %v50
    %v63 = vcombine.high %v48, %v50
    %v65 = vunpack.c.l.s4 1983009808
    %v66 = vunpack.c.0.s8 %v65
    %v67 = vlaneseq
    %v68 = vshrl.u32 %v67, 7
    %v69 = vsub.s32 %v66, %v68
    %v70 = vrot.slane %v60, %v69
    %v72 = vunpack.c.l.s4 1983009808
    %v73 = vunpack.c.0.s8 %v72
    %v74 = vlaneseq
    %v75 = vshrl.u32 %v74, 7
    %v76 = vsub.s32 %v73, %v75
    %v77 = vrot.slane %v61, %v76
    %v79 = vunpack.c.l.s4 1983009808
    %v80 = vunpack.c.0.s8 %v79
    %v81 = vlaneseq
    %v82 = vshrl.u32 %v81, 7
    %v83 = vsub.s32 %v80, %v82
    %v84 = vrot.slane %v62, %v83
    %v86 = vunpack.c.l.s4 1983009808
    %v87 = vunpack.c.0.s8 %v86
    %v88 = vlaneseq
    %v89 = vshrl.u32 %v88, 7
    %v90 = vsub.s32 %v87, %v89
    %v91 = vrot.slane %v63, %v90
    %v92 = vcombine.low %v70, %v84
    %v93 = vcombine.high %v70, %v84
    %v94 = vcombine.low %v77, %v91
    %v95 = vcombine.high %v77, %v91
    %v96 = vcombine.low %v45, %v47
    %v97 = vcombine.high %v45, %v47
    %v98 = vcombine.low %v49, %v51
    %v99 = vcombine.high %v49, %v51
    %v101 = vunpack.c.l.s4 1983009808
    %v102 = vunpack.c.0.s8 %v101
    %v103 = vlaneseq
    %v104 = vshrl.u32 %v103, 7
    %v105 = vsub.s32 %v102, %v104
    %v106 = vrot.slane %v96, %v105
    %v108 = vunpack.c.l.s4 1983009808
    %v109 = vunpack.c.0.s8 %v108
    %v110 = vlaneseq
    %v111 = vshrl.u32 %v110, 7
    %v112 = vsub.s32 %v109, %v111
    %v113 = vrot.slane %v97, %v112
    %v115 = vunpack.c.l.s4 1983009808
    %v116 = vunpack.c.0.s8 %v115
    %v117 = vlaneseq
    %v118 = vshrl.u32 %v117, 7
    %v119 = vsub.s32 %v116, %v118
    %v120 = vrot.slane %v98, %v119
    %v122 = vunpack.c.l.s4 1983009808
    %v123 = vunpack.c.0.s8 %v122
    %v124 = vlaneseq
    %v125 = vshrl.u32 %v124, 7
    %v126 = vsub.s32 %v123, %v125
    %v127 = vrot.slane %v99, %v126
    %v128 = vcombine.low %v106, %v120
    %v129 = vcombine.high %v106, %v120
    %v130 = vcombine.low %v113, %v127
    %v138 = vpack.c.bf16 %v92, %v92
    %v139 = vpack.c.bf16 %v93, %v93
    %v140 = vpack.c.bf16 %v94, %v94
    %v141 = vpack.c.bf16 %v95, %v95
    %v142 = vpack.c.bf16 %v128, %v128
    %v143 = vpack.c.bf16 %v129, %v129
    %v144 = vpack.c.bf16 %v130, %v130
    %v145 = vld [vmem:[#allocation5] sm:$0xff]
    %v146 = vld [vmem:[#allocation5 + $0x8] sm:$0xff]
    %v147 = vld [vmem:[#allocation5 + $0x10] sm:$0xff]
    %v148 = vld [vmem:[#allocation5 + $0x18] sm:$0xff]
    %v149 = vld [vmem:[#allocation5 + $0x20] sm:$0xff]
    %v150 = vld [vmem:[#allocation5 + $0x28] sm:$0xff]
    %v151 = vld [vmem:[#allocation5 + $0x30] sm:$0xff]
    %v152 = vld [vmem:[#allocation5 + $0x38] sm:$0xff]
    %v153 = vld [vmem:[#allocation5 + $0x40] sm:$0xff]
    %v154 = vld [vmem:[#allocation5 + $0x48] sm:$0xff]
    %v155 = vld [vmem:[#allocation5 + $0x50] sm:$0xff]
    %v156 = vld [vmem:[#allocation5 + $0x58] sm:$0xff]
    %v157 = vld [vmem:[#allocation5 + $0x60] sm:$0xff]
    %v158 = vld [vmem:[#allocation5 + $0x68] sm:$0xff]
    %v159 = vld [vmem:[#allocation5 + $0x70] sm:$0xff]
    %v160 = vld [vmem:[#allocation5 + $0x78] sm:$0xff]
    %v161 = vld [vmem:[#allocation5 + $0x80] sm:$0xff]
    %v162 = vld [vmem:[#allocation5 + $0x88] sm:$0xff]
    %v163 = vld [vmem:[#allocation5 + $0x90] sm:$0xff]
    %v164 = vld [vmem:[#allocation5 + $0x98] sm:$0xff]
    %v165 = vld [vmem:[#allocation5 + $0xa0] sm:$0xff]
    %v166 = vld [vmem:[#allocation5 + $0xa8] sm:$0xff]
    %v167 = vld [vmem:[#allocation5 + $0xb0] sm:$0xff]
    %v168 = vld [vmem:[#allocation5 + $0xb8] sm:$0xff]
    %v169 = vld [vmem:[#allocation5 + $0xc0] sm:$0xff]
    %v170 = vld [vmem:[#allocation5 + $0xc8] sm:$0xff]
    %v171 = vld [vmem:[#allocation5 + $0xd0] sm:$0xff]
    %v172 = vld [vmem:[#allocation5 + $0xd8] sm:$0xff]
    %v173 = vld [vmem:[#allocation5 + $0xe0] sm:$0xff]
    %v174 = vld [vmem:[#allocation5 + $0xe8] sm:$0xff]
    %v175 = vld [vmem:[#allocation5 + $0xf0] sm:$0xff]
    %v176 = vld [vmem:[#allocation5 + $0xf8] sm:$0xff]
    %v177 = vld [vmem:[#allocation5 + $0x100] sm:$0xff]
    %v178 = vld [vmem:[#allocation5 + $0x108] sm:$0xff]
    %v179 = vld [vmem:[#allocation5 + $0x110] sm:$0xff]
    %v180 = vld [vmem:[#allocation5 + $0x118] sm:$0xff]
    %v181 = vld [vmem:[#allocation5 + $0x120] sm:$0xff]
    %v182 = vld [vmem:[#allocation5 + $0x128] sm:$0xff]
    %v183 = vld [vmem:[#allocation5 + $0x130] sm:$0xff]
    %v184 = vld [vmem:[#allocation5 + $0x138] sm:$0xff]
    %v185 = vld [vmem:[#allocation5 + $0x140] sm:$0xff]
    %v186 = vld [vmem:[#allocation5 + $0x148] sm:$0xff]
    %v187 = vld [vmem:[#allocation5 + $0x150] sm:$0xff]
    %v188 = vld [vmem:[#allocation5 + $0x158] sm:$0xff]
    %v189 = vld [vmem:[#allocation5 + $0x160] sm:$0xff]
    %v190 = vld [vmem:[#allocation5 + $0x168] sm:$0xff]
    %v191 = vld [vmem:[#allocation5 + $0x170] sm:$0xff]
    %v192 = vld [vmem:[#allocation5 + $0x178] sm:$0xff]
    %v193 = vld [vmem:[#allocation5 + $0x180] sm:$0xff]
    %v194 = vld [vmem:[#allocation5 + $0x188] sm:$0xff]
    %v195 = vld [vmem:[#allocation5 + $0x190] sm:$0xff]
    %v196 = vld [vmem:[#allocation5 + $0x198] sm:$0xff]
    %v197 = vld [vmem:[#allocation5 + $0x1a0] sm:$0xff]
    %v198 = vld [vmem:[#allocation5 + $0x1a8] sm:$0xff]
    %v199 = vld [vmem:[#allocation5 + $0x1b0] sm:$0xff]
    %v200 = vld [vmem:[#allocation5 + $0x1b8] sm:$0xff]
    %v201 = vld [vmem:[#allocation5 + $0x1c0] sm:$0xff]
    %v202 = vld [vmem:[#allocation5 + $0x1c8] sm:$0xff]
    %v203 = vld [vmem:[#allocation5 + $0x1d0] sm:$0xff]
    %v204 = vld [vmem:[#allocation5 + $0x1d8] sm:$0xff]
    %v205 = vld [vmem:[#allocation5 + $0x1e0] sm:$0xff]
    %v206 = vld [vmem:[#allocation5 + $0x1e8] sm:$0xff]
    %v207 = vld [vmem:[#allocation5 + $0x1f0] sm:$0xff]
    %v208 = vld [vmem:[#allocation5 + $0x1f8] sm:$0xff]
    %v209 = vld [vmem:[#allocation5 + $0x200] sm:$0xff]
    %v210 = vld [vmem:[#allocation5 + $0x208] sm:$0xff]
    %v211 = vld [vmem:[#allocation5 + $0x210] sm:$0xff]
    %v212 = vld [vmem:[#allocation5 + $0x218] sm:$0xff]
    %v213 = vld [vmem:[#allocation5 + $0x220] sm:$0xff]
    %v214 = vld [vmem:[#allocation5 + $0x228] sm:$0xff]
    %v215 = vld [vmem:[#allocation5 + $0x230] sm:$0xff]
    %v216 = vld [vmem:[#allocation5 + $0x238] sm:$0xff]
    %v217 = vld [vmem:[#allocation5 + $0x240] sm:$0xff]
    %v218 = vld [vmem:[#allocation5 + $0x248] sm:$0xff]
    %v219 = vld [vmem:[#allocation5 + $0x250] sm:$0xff]
    %v220 = vld [vmem:[#allocation5 + $0x258] sm:$0xff]
    %v221 = vld [vmem:[#allocation5 + $0x260] sm:$0xff]
    %v222 = vld [vmem:[#allocation5 + $0x268] sm:$0xff]
    %v223 = vld [vmem:[#allocation5 + $0x270] sm:$0xff]
    %v224 = vld [vmem:[#allocation5 + $0x278] sm:$0xff]
    %v225 = vld [vmem:[#allocation5 + $0x280] sm:$0xff]
    %v226 = vld [vmem:[#allocation5 + $0x288] sm:$0xff]
    %v227 = vld [vmem:[#allocation5 + $0x290] sm:$0xff]
    %v228 = vld [vmem:[#allocation5 + $0x298] sm:$0xff]
    %v229 = vld [vmem:[#allocation5 + $0x2a0] sm:$0xff]
    %v230 = vld [vmem:[#allocation5 + $0x2a8] sm:$0xff]
    %v231 = vld [vmem:[#allocation5 + $0x2b0] sm:$0xff]
    %v232 = vld [vmem:[#allocation5 + $0x2b8] sm:$0xff]
    %v233 = vld [vmem:[#allocation5 + $0x2c0] sm:$0xff]
    %v234 = vld [vmem:[#allocation5 + $0x2c8] sm:$0xff]
    %v235 = vld [vmem:[#allocation5 + $0x2d0] sm:$0xff]
    %v236 = vld [vmem:[#allocation5 + $0x2d8] sm:$0xff]
    %v237 = vld [vmem:[#allocation5 + $0x2e0] sm:$0xff]
    %v238 = vld [vmem:[#allocation5 + $0x2e8] sm:$0xff]
    %v239 = vld [vmem:[#allocation5 + $0x2f0] sm:$0xff]
    %v240 = vld [vmem:[#allocation5 + $0x2f8] sm:$0xff]
    %v241 = vld [vmem:[#allocation5 + $0x300] sm:$0xff]
    %v242 = vld [vmem:[#allocation5 + $0x308] sm:$0xff]
    %v243 = vpack.c.bf16 %v146, %v145
    %v244 = vpack.c.bf16 %v148, %v147
    %v245 = vpack.c.bf16 %v150, %v149
    %v246 = vpack.c.bf16 %v152, %v151
    %v247 = vpack.c.bf16 %v154, %v153
    %v248 = vpack.c.bf16 %v156, %v155
    %v249 = vpack.c.bf16 %v158, %v157
    %v250 = vpack.c.bf16 %v160, %v159
    %v251 = vpack.c.bf16 %v162, %v161
    %v252 = vpack.c.bf16 %v164, %v163
    %v253 = vpack.c.bf16 %v166, %v165
    %v254 = vpack.c.bf16 %v168, %v167
    %v255 = vpack.c.bf16 %v170, %v169
    %v256 = vpack.c.bf16 %v172, %v171
    %v257 = vpack.c.bf16 %v174, %v173
    %v258 = vpack.c.bf16 %v176, %v175
    %v259 = vpack.c.bf16 %v178, %v177
    %v260 = vpack.c.bf16 %v180, %v179
    %v261 = vpack.c.bf16 %v182, %v181
    %v262 = vpack.c.bf16 %v184, %v183
    %v263 = vpack.c.bf16 %v186, %v185
    %v264 = vpack.c.bf16 %v188, %v187
    %v265 = vpack.c.bf16 %v190, %v189
    %v266 = vpack.c.bf16 %v192, %v191
    %v267 = vpack.c.bf16 %v194, %v193
    %v268 = vpack.c.bf16 %v196, %v195
    %v269 = vpack.c.bf16 %v198, %v197
    %v270 = vpack.c.bf16 %v200, %v199
    %v271 = vpack.c.bf16 %v202, %v201
    %v272 = vpack.c.bf16 %v204, %v203
    %v273 = vpack.c.bf16 %v206, %v205
    %v274 = vpack.c.bf16 %v208, %v207
    %v275 = vpack.c.bf16 %v210, %v209
    %v276 = vpack.c.bf16 %v212, %v211
    %v277 = vpack.c.bf16 %v214, %v213
    %v278 = vpack.c.bf16 %v216, %v215
    %v279 = vpack.c.bf16 %v218, %v217
    %v280 = vpack.c.bf16 %v220, %v219
    %v281 = vpack.c.bf16 %v222, %v221
    %v282 = vpack.c.bf16 %v224, %v223
    %v283 = vpack.c.bf16 %v226, %v225
    %v284 = vpack.c.bf16 %v228, %v227
    %v285 = vpack.c.bf16 %v230, %v229
    %v286 = vpack.c.bf16 %v232, %v231
    %v287 = vpack.c.bf16 %v234, %v233
    %v288 = vpack.c.bf16 %v236, %v235
    %v289 = vpack.c.bf16 %v238, %v237
    %v290 = vpack.c.bf16 %v240, %v239
    %v291 = vpack.c.bf16 %v242, %v241
    %v292 = vld [vmem:[%s2] sm:$0x1]
    %v294 = vlaneseq
    %v295 = vshrl.u32 %v294, 7
    %v296 = vsub.s32 0, %v295
    %v297 = vrot.slane %v292, %v296
    %vm299 = vcmask 130048
    %v301 = vsel %vm299, %v144, 0
    %303 = vmatprep.subr.bf16.mxu0 0
    %304 = vmatpush1.bf16.msra.mxu0 %v243
    %305 = vmatprep.subr.bf16.mxu0 0
    %306 = vmatpush1.bf16.msra.mxu0 %v244
    %307 = vmatprep.subr.bf16.mxu0 0
    %308 = vmatpush1.bf16.msra.mxu0 %v245
    %309 = vmatprep.subr.bf16.mxu0 0
    %310 = vmatpush1.bf16.msra.mxu0 %v246
    %311 = vmatprep.subr.bf16.mxu0 0
    %312 = vmatpush1.bf16.msra.mxu0 %v247
    %313 = vmatprep.subr.bf16.mxu0 0
    %314 = vmatpush1.bf16.msra.mxu0 %v248
    %315 = vmatprep.subr.bf16.mxu0 0
    %316 = vmatpush1.bf16.msra.mxu0 %v249
    %317 = vmatprep.subr.bf16.mxu0 0
    %318 = vmatpush1.bf16.msra.mxu0 %v250
    %319 = vmatprep.subr.bf16.mxu0 0
    %320 = vmatpush1.bf16.msra.mxu0 %v251
    %321 = vmatprep.subr.bf16.mxu0 0
    %322 = vmatpush1.bf16.msra.mxu0 %v252
    %323 = vmatprep.subr.bf16.mxu0 0
    %324 = vmatpush1.bf16.msra.mxu0 %v253
    %325 = vmatprep.subr.bf16.mxu0 0
    %326 = vmatpush1.bf16.msra.mxu0 %v254
    %327 = vmatprep.subr.bf16.mxu0 0
    %328 = vmatpush1.bf16.msra.mxu0 %v255
    %329 = vmatprep.subr.bf16.mxu0 0
    %330 = vmatpush1.bf16.msra.mxu0 %v256
    %331 = vmatprep.subr.bf16.mxu0 0
    %332 = vmatpush1.bf16.msra.mxu0 %v257
    %333 = vmatprep.subr.bf16.mxu0 0
    %334 = vmatpush1.bf16.msra.mxu0 %v258
    %335 = vmatprep.mubr.bf16.mxu0 %v139
    %336 = vmatmul.mubr.bf16.gmra.mrb[0].mxu0 %v138
    %v337 = vpop.f32.mrb[0].mxu0
    %v338 = vadd.f32 %v297, %v337
    %v339 = vpop.f32.mrb[0].mxu0
    %v340 = vpop.f32.mrb[0].mxu0
    %v341 = vpop.f32.mrb[0].mxu0
    %342 = vdwg.mxu0
    %343 = vmatprep.subr.bf16.mxu0 0
    %344 = vmatpush1.bf16.msra.mxu0 %v259
    %345 = vmatprep.subr.bf16.mxu0 0
    %346 = vmatpush1.bf16.msra.mxu0 %v260
    %347 = vmatprep.subr.bf16.mxu0 0
    %348 = vmatpush1.bf16.msra.mxu0 %v261
    %349 = vmatprep.subr.bf16.mxu0 0
    %350 = vmatpush1.bf16.msra.mxu0 %v262
    %351 = vmatprep.subr.bf16.mxu0 0
    %352 = vmatpush1.bf16.msra.mxu0 %v263
    %353 = vmatprep.subr.bf16.mxu0 0
    %354 = vmatpush1.bf16.msra.mxu0 %v264
    %355 = vmatprep.subr.bf16.mxu0 0
    %356 = vmatpush1.bf16.msra.mxu0 %v265
    %357 = vmatprep.subr.bf16.mxu0 0
    %358 = vmatpush1.bf16.msra.mxu0 %v266
    %359 = vmatprep.subr.bf16.mxu0 0
    %360 = vmatpush1.bf16.msra.mxu0 %v267
    %361 = vmatprep.subr.bf16.mxu0 0
    %362 = vmatpush1.bf16.msra.mxu0 %v268
    %363 = vmatprep.subr.bf16.mxu0 0
    %364 = vmatpush1.bf16.msra.mxu0 %v269
    %365 = vmatprep.subr.bf16.mxu0 0
    %366 = vmatpush1.bf16.msra.mxu0 %v270
    %367 = vmatprep.subr.bf16.mxu0 0
    %368 = vmatpush1.bf16.msra.mxu0 %v271
    %369 = vmatprep.subr.bf16.mxu0 0
    %370 = vmatpush1.bf16.msra.mxu0 %v272
    %371 = vmatprep.subr.bf16.mxu0 0
    %372 = vmatpush1.bf16.msra.mxu0 %v273
    %373 = vmatprep.subr.bf16.mxu0 0
    %374 = vmatpush1.bf16.msra.mxu0 %v274
    %375 = vmatprep.mubr.bf16.mxu0 %v141
    %376 = vmatmul.mubr.bf16.gmra.mrb[0].mxu0 %v140
    %v377 = vpop.f32.mrb[0].mxu0
    %v378 = vadd.f32 %v338, %v377
    %v379 = vpop.f32.mrb[0].mxu0
    %v380 = vpop.f32.mrb[0].mxu0
    %v381 = vpop.f32.mrb[0].mxu0
    %382 = vdwg.mxu0
    %383 = vmatprep.subr.bf16.mxu0 0
    %384 = vmatpush1.bf16.msra.mxu0 %v275
    %385 = vmatprep.subr.bf16.mxu0 0
    %386 = vmatpush1.bf16.msra.mxu0 %v276
    %387 = vmatprep.subr.bf16.mxu0 0
    %388 = vmatpush1.bf16.msra.mxu0 %v277
    %389 = vmatprep.subr.bf16.mxu0 0
    %390 = vmatpush1.bf16.msra.mxu0 %v278
    %391 = vmatprep.subr.bf16.mxu0 0
    %392 = vmatpush1.bf16.msra.mxu0 %v279
    %393 = vmatprep.subr.bf16.mxu0 0
    %394 = vmatpush1.bf16.msra.mxu0 %v280
    %395 = vmatprep.subr.bf16.mxu0 0
    %396 = vmatpush1.bf16.msra.mxu0 %v281
    %397 = vmatprep.subr.bf16.mxu0 0
    %398 = vmatpush1.bf16.msra.mxu0 %v282
    %399 = vmatprep.subr.bf16.mxu0 0
    %400 = vmatpush1.bf16.msra.mxu0 %v283
    %401 = vmatprep.subr.bf16.mxu0 0
    %402 = vmatpush1.bf16.msra.mxu0 %v284
    %403 = vmatprep.subr.bf16.mxu0 0
    %404 = vmatpush1.bf16.msra.mxu0 %v285
    %405 = vmatprep.subr.bf16.mxu0 0
    %406 = vmatpush1.bf16.msra.mxu0 %v286
    %407 = vmatprep.subr.bf16.mxu0 0
    %408 = vmatpush1.bf16.msra.mxu0 %v287
    %409 = vmatprep.subr.bf16.mxu0 0
    %410 = vmatpush1.bf16.msra.mxu0 %v288
    %411 = vmatprep.subr.bf16.mxu0 0
    %412 = vmatpush1.bf16.msra.mxu0 %v289
    %413 = vmatprep.subr.bf16.mxu0 0
    %414 = vmatpush1.bf16.msra.mxu0 %v290
    %415 = vmatprep.mubr.bf16.mxu0 %v143
    %416 = vmatmul.mubr.bf16.gmra.mrb[0].mxu0 %v142
    %v417 = vpop.f32.mrb[0].mxu0
    %v418 = vadd.f32 %v378, %v417
    %v419 = vpop.f32.mrb[0].mxu0
    %v420 = vpop.f32.mrb[0].mxu0
    %v421 = vpop.f32.mrb[0].mxu0
    %422 = vdwg.mxu0
    %423 = vmatprep.subr.bf16.mxu0 0
    %424 = vmatpush1.bf16.msra.mxu0 %v291
    %425 = vmatprep.subr.bf16.mxu0 0
    %426 = vmatpush1.bf16.msra.mxu0 0
    %427 = vmatprep.subr.bf16.mxu0 0
    %428 = vmatpush1.bf16.msra.mxu0 0
    %429 = vmatprep.subr.bf16.mxu0 0
    %430 = vmatpush1.bf16.msra.mxu0 0
    %431 = vmatprep.subr.bf16.mxu0 0
    %432 = vmatpush1.bf16.msra.mxu0 0
    %433 = vmatprep.subr.bf16.mxu0 0
    %434 = vmatpush1.bf16.msra.mxu0 0
    %435 = vmatprep.subr.bf16.mxu0 0
    %436 = vmatpush1.bf16.msra.mxu0 0
    %437 = vmatprep.subr.bf16.mxu0 0
    %438 = vmatpush1.bf16.msra.mxu0 0
    %439 = vmatprep.subr.bf16.mxu0 0
    %440 = vmatpush1.bf16.msra.mxu0 0
    %441 = vmatprep.subr.bf16.mxu0 0
    %442 = vmatpush1.bf16.msra.mxu0 0
    %443 = vmatprep.subr.bf16.mxu0 0
    %444 = vmatpush1.bf16.msra.mxu0 0
    %445 = vmatprep.subr.bf16.mxu0 0
    %446 = vmatpush1.bf16.msra.mxu0 0
    %447 = vmatprep.subr.bf16.mxu0 0
    %448 = vmatpush1.bf16.msra.mxu0 0
    %449 = vmatprep.subr.bf16.mxu0 0
    %450 = vmatpush1.bf16.msra.mxu0 0
    %451 = vmatprep.subr.bf16.mxu0 0
    %452 = vmatpush1.bf16.msra.mxu0 0
    %453 = vmatprep.subr.bf16.mxu0 0
    %454 = vmatpush1.bf16.msra.mxu0 0
    %455 = vmatprep.mubr.bf16.mxu0 0
    %456 = vmatmul.mubr.bf16.gmra.mrb[0].mxu0 %v301
    %v457 = vpop.f32.mrb[0].mxu0
    %v458 = vadd.f32 %v418, %v457
    %v459 = vpop.f32.mrb[0].mxu0
    %v460 = vpop.f32.mrb[0].mxu0
    %v461 = vpop.f32.mrb[0].mxu0
    %462 = vdwg.mxu0
    %463 = vmax.xlane.f32.xlu0 %v458
    %v464 = vpop.xlane.xlu0 %463
    %v465 = vsub.f32 %v458, %v464
    %v466 = vmul.f32 %v465, 1.442695
    %v467 = vpow.pop %v466
    %468 = vadd.xlane.f32.xlu0 %v467
    %v469 = vpop.xlane.xlu0 %468
    %v470 = vlog2.pop %v469
    %v471 = vmul.f32 %v470, 0.6931472
    %v472 = vsub.f32 %v465, %v471
    %vm473 = vcmask 80896
    %474 = vst.msk [vmem:[#allocation7] sm:$0xff] %vm473, %v472
    // Predicated region
    $region22: #{tpu_custom_call.1} parent=1 // pred_check
      _
    $region23: #{tpu_custom_call.1} parent=1 // pred_check_branch
      %476 = sbr.rel (0) target = $region25
    $region24: #{tpu_custom_call.1} parent=1 // pred_region
      %s478 = ssub.s32 128, 32
      %479 = vsyncadd [#allocation4], %s478
      %s480 = sshll.u32 [#allocation7], 4
      %s481 = int_to_ptr.vmem [resolvable:$true] %s480
      %486 = dma.vmem_to_hbm [thread:$0]  %s481, 32, %s3, [#allocation4], 32, 32, 2
    $region25: #{tpu_custom_call.1} parent=1 // pred_fallthru
      _
    // Predicated region
    $region26: #{tpu_custom_call.1} parent=1 // pred_check
      _
    $region27: #{tpu_custom_call.1} parent=1 // pred_check_branch
      %488 = sbr.rel (0) target = $region29
    $region28: #{tpu_custom_call.1} parent=1 // pred_region
      %489 = dma.done [#allocation4], 128
    $region29: #{tpu_custom_call.1} parent=1 // pred_fallthru
      _
    %490 = vsyncpa [#allocation3], 1
    %491 = vsyncpa [#allocation6], 1
    %492 = vsyncpa [#allocation4], 1

</llo_original>
